<compile_context>
chip_gen: v7x
topology: tpu7x:2x2x1
jax: 0.10.0
libtpu: 0.0.40
codegen_flags: <defaults>
</compile_context>

<pallas_src>
import numpy as np
import jax
import jax.numpy as jnp
from jax import lax
from jax.experimental import pallas as pl
from jax.experimental.pallas import tpu as pltpu

EPS = 1e-6


def _round_up(x, m):
    return ((x + m - 1) // m) * m


# ----------------------------------------------------------------------------
# Host-side replication of FlattenLoss.__init__ (pure numpy, no torch).
# ----------------------------------------------------------------------------
def build_flatten_indices(faces):
    faces = np.asarray(faces, dtype=np.int64)
    vertices = list(
        set(
            [
                tuple(v)
                for v in np.sort(
                    np.concatenate((faces[:, 0:2], faces[:, 1:3]), axis=0), axis=-1
                )
            ]
        )
    )
    v0s = np.array([v[0] for v in vertices], "int32")
    v1s = np.array([v[1] for v in vertices], "int32")
    v2s = []
    v3s = []
    for v0, v1 in zip(v0s, v1s):
        count = 0
        for face in faces:
            if v0 in face and v1 in face:
                v = np.copy(face)
                v = v[v != v0]
                v = v[v != v1]
                if count == 0:
                    v2s.append(int(v[0]))
                    count += 1
                else:
                    v3s.append(int(v[0]))
    v2s = np.array(v2s, "int32")
    v3s = np.array(v3s, "int32")
    assert len(v2s) == len(v0s) and len(v3s) == len(v0s), "mesh must be closed/manifold"
    return v0s, v1s, v2s, v3s


# ----------------------------------------------------------------------------
# Per-generation hardware queries (defensive; fall back to safe defaults).
# ----------------------------------------------------------------------------
def _vmem_allowance_bytes():
    cap = 64 * 1024 * 1024  # conservative default = v7x physical VMEM per TC
    try:
        v = getattr(pltpu.get_tpu_info(), "vmem_capacity_bytes", None)
        if v:
            cap = int(v)
    except Exception:
        pass
    # ~48 MiB on v7x (64 MiB physical), ~96 MiB on v5e/v6e (128 MiB physical).
    return int(min(cap * 3 // 4, 96 * 1024 * 1024))


def _num_tensorcores():
    # TODO(synk): verify on v7x (xprof) that a size-2 "parallel" grid axis really
    # shards across both TensorCores; if not, switch to CORE_PARALLEL / core_map.
    try:
        info = pltpu.get_tpu_info()
        for name in ("num_cores", "core_count", "num_tensorcores",
                     "tensorcore_count", "cores_per_chip"):
            v = getattr(info, name, None)
            if isinstance(v, (int, np.integer)) and int(v) >= 1:
                return int(v)
    except Exception:
        pass
    try:
        d = jax.local_devices()[0]
        for name in ("num_cores", "core_count"):
            v = getattr(d, name, None)
            if isinstance(v, (int, np.integer)) and int(v) >= 1:
                return int(v)
    except Exception:
        pass
    return 1


# ----------------------------------------------------------------------------
# Pallas kernel: per-edge dihedral-projection cosine, (cos+1)^2, edge-sum.
# ----------------------------------------------------------------------------
def _make_flatten_kernel(n_edges, tile_e, tiles_per_split):
    n_chunks = tile_e // 128

    def _fold_lanes(x):  # (B, tile_e) -> (B, 128): vreg-aligned VALU adds only.
        acc = x[:, 0:128]
        for c in range(1, n_chunks):
            acc = acc + x[:, c * 128:(c + 1) * 128]
        return acc

    def kernel(g_ref, out_ref):
        # g_ref  : (3, 4, B, tile_e) f32  (coord, vertex-role, batch, edge)
        # out_ref: (1, B, 128) f32        resident accumulator across grid axis 1
        @pl.when(pl.program_id(1) == 0)
        def _():
            out_ref[...] = jnp.zeros_like(out_ref)

        g = g_ref[...]
        v0 = g[:, 0]                           # (3, B, tile_e)
        a1 = g[:, 1] - v0
        b1 = g[:, 2] - v0
        b2 = g[:, 3] - v0

        a1l2 = jnp.sum(a1 * a1, axis=0)        # (B, tile_e)
        b1l2 = jnp.sum(b1 * b1, axis=0)
        b2l2 = jnp.sum(b2 * b2, axis=0)
        ab1 = jnp.sum(a1 * b1, axis=0)
        ab2 = jnp.sum(a1 * b2, axis=0)
        b1b2 = jnp.sum(b1 * b2, axis=0)

        inv_a = pl.reciprocal(a1l2 + EPS, approx=True)             # EUP push
        # |b - a (a.b)/|a|^2|^2 = |b|^2 - (a.b)^2/|a|^2 ; clamp f32 cancellation.
        cb1l2 = jnp.maximum(b1l2 - ab1 * ab1 * inv_a, 0.0)
        cb2l2 = jnp.maximum(b2l2 - ab2 * ab2 * inv_a, 0.0)
        cbdot = b1b2 - ab1 * ab2 * inv_a
        cos = cbdot * lax.rsqrt((cb1l2 + EPS) * (cb2l2 + EPS))     # fused rsqrt, EUP
        per_edge = (cos + 1.0) * (cos + 1.0)

        tile_idx = pl.program_id(0) * tiles_per_split + pl.program_id(1)
        tile_start = tile_idx * tile_e

        @pl.when(tile_start + tile_e <= n_edges)
        def _():  # interior tile: no padded lanes -> unmasked path.
            out_ref[...] += _fold_lanes(per_edge)[None]

        @pl.when(tile_start + tile_e > n_edges)
        def _():  # boundary / fully-padded tile: mask lanes >= n_edges.
            lane = lax.broadcasted_iota(jnp.int32, per_edge.shape, 1) + tile_start
            out_ref[...] += _fold_lanes(
                jnp.where(lane < n_edges, per_edge, 0.0))[None]

    return kernel


def flatten_loss_pallas(vertices, v0s, v1s, v2s, v3s, average=False, tile_e=None):
    vertices = jnp.asarray(vertices, jnp.float32)
    B, V, C = vertices.shape
    assert C == 3
    E = int(np.shape(v0s)[0])
    assert E >= 1

    # ---- tiling: size edge tiles from the per-generation VMEM allowance --------
    vmem_allow = _vmem_allowance_bytes()
    sub_b = _round_up(B, 8)                     # VMEM sublane padding of batch dim
    bytes_per_lane = 2 * 3 * 4 * sub_b * 4      # 2 buffers x (3,4,sub_b) f32 / lane
    if tile_e is None:
        input_budget = vmem_allow // 3          # leave 2/3 for intermediates/spill
        tile_e = (input_budget // bytes_per_lane) // 128 * 128
        tile_e = int(max(128, min(tile_e, 32 * 1024)))
    tile_e = int(min(tile_e, _round_up(E, 128)))
    assert tile_e % 128 == 0

    n_tiles = -(-E // tile_e)
    if _num_tensorcores() >= 2 and n_tiles >= 2:
        nsplit = 2                              # feeds both TensorCores on v7x
        n_tiles = _round_up(n_tiles, 2)
    else:
        nsplit = 1                              # no wasted padded tile on v5e/v6e
    tiles_per_split = n_tiles // nsplit
    Ep = n_tiles * tile_e

    # ---- host-side index padding: dummy degenerate edges, masked in-kernel -----
    idx_np = np.zeros((4, Ep), np.int32)
    idx_np[0, :E] = np.asarray(v0s, np.int32)
    idx_np[1, :E] = np.asarray(v1s, np.int32)
    idx_np[2, :E] = np.asarray(v2s, np.int32)
    idx_np[3, :E] = np.asarray(v3s, np.int32)
    idx = jnp.asarray(idx_np)

    # ---- single gather, single kernel input ------------------------------------
    # g[c, j, b, e] = vertices[b, idx[j, e], c]   -> shape (3, 4, B, Ep)
    vt = jnp.transpose(vertices, (2, 0, 1))     # (3, B, V)  (tiny)
    dnums = lax.GatherDimensionNumbers(
        offset_dims=(0, 2), collapsed_slice_dims=(2,), start_index_map=(2,))
    g = lax.gather(vt, idx[..., None], dnums, slice_sizes=(3, B, 1),
                   mode=lax.GatherScatterMode.PROMISE_IN_BOUNDS)

    in_spec = pl.BlockSpec(
        (3, 4, B, tile_e), lambda s, i: (0, 0, 0, s * tiles_per_split + i))
    out_spec = pl.BlockSpec((1, B, 128), lambda s, i: (s, 0, 0))

    out = pl.pallas_call(
        _make_flatten_kernel(E, tile_e, tiles_per_split),
        out_shape=jax.ShapeDtypeStruct((nsplit, B, 128), jnp.float32),
        grid=(nsplit, tiles_per_split),
        in_specs=[in_spec],
        out_specs=out_spec,
        compiler_params=pltpu.CompilerParams(
            dimension_semantics=("parallel", "arbitrary"),
            vmem_limit_bytes=int(vmem_allow)),
    )(g)

    loss = jnp.sum(out, axis=(0, 2))            # (B,)  final cross-lane reduce
    if average:
        return jnp.sum(loss) / B
    return loss


# ----------------------------------------------------------------------------
# Pure-numpy float64 reference (mirrors the torch forward exactly).
# ----------------------------------------------------------------------------
def flatten_loss_ref(vertices, v0s, v1s, v2s, v3s, eps=1e-6):
    v = np.asarray(vertices, np.float64)
    v0 = v[:, v0s, :]
    v1 = v[:, v1s, :]
    v2 = v[:, v2s, :]
    v3 = v[:, v3s, :]
    a1 = v1 - v0
    b1 = v2 - v0
    a1l2 = (a1 ** 2).sum(-1)
    b1l2 = (b1 ** 2).sum(-1)
    a1l1 = np.sqrt(a1l2 + eps)
    b1l1 = np.sqrt(b1l2 + eps)
    ab1 = (a1 * b1).sum(-1)
    cos1 = ab1 / (a1l1 * b1l1 + eps)
    sin1 = np.sqrt(1 - cos1 ** 2 + eps)
    c1 = a1 * (ab1 / (a1l2 + eps))[:, :, None]
    cb1 = b1 - c1
    cb1l1 = b1l1 * sin1
    a2 = v1 - v0
    b2 = v3 - v0
    a2l2 = (a2 ** 2).sum(-1)
    b2l2 = (b2 ** 2).sum(-1)
    a2l1 = np.sqrt(a2l2 + eps)
    b2l1 = np.sqrt(b2l2 + eps)
    ab2 = (a2 * b2).sum(-1)
    cos2 = ab2 / (a2l1 * b2l1 + eps)
    sin2 = np.sqrt(1 - cos2 ** 2 + eps)
    c2 = a2 * (ab2 / (a2l2 + eps))[:, :, None]
    cb2 = b2 - c2
    cb2l1 = b2l1 * sin2
    cos = (cb1 * cb2).sum(-1) / (cb1l1 * cb2l1 + eps)
    return ((cos + 1) ** 2).sum(-1)


if __name__ == "__main__":
    # Small closed mesh: octahedron (6 vertices, 8 faces, 12 interior edges).
    faces = np.array(
        [
            [0, 1, 2], [0, 2, 3], [0, 3, 4], [0, 4, 1],
            [5, 2, 1], [5, 3, 2], [5, 4, 3], [5, 1, 4],
        ],
        dtype=np.int64,
    )
    v0s, v1s, v2s, v3s = build_flatten_indices(faces)

    B, V = 2, 6
    key = jax.random.PRNGKey(0)
    vertices = jax.random.normal(key, (B, V, 3), dtype=jnp.float32)

    # Test 1: tiny mesh, single edge tile.
    loss = jax.block_until_ready(flatten_loss_pallas(vertices, v0s, v1s, v2s, v3s))
    ref = flatten_loss_ref(np.asarray(vertices), v0s, v1s, v2s, v3s)
    assert loss.shape == (B,)
    assert np.allclose(np.asarray(loss), ref, rtol=5e-3, atol=5e-3), (loss, ref)

    # Test 2: replicated edge list -> multiple edge tiles, resident accumulator,
    # and the predicated padded-lane masking on the final tile.
    reps = 150
    v0b, v1b, v2b, v3b = (np.tile(a, reps) for a in (v0s, v1s, v2s, v3s))
    loss2 = jax.block_until_ready(
        flatten_loss_pallas(vertices, v0b, v1b, v2b, v3b, tile_e=256))
    ref2 = flatten_loss_ref(np.asarray(vertices), v0b, v1b, v2b, v3b)
    assert np.allclose(np.asarray(loss2), ref2, rtol=5e-3, atol=0.5), (loss2, ref2)

    # average=True path.
    lavg = jax.block_until_ready(
        flatten_loss_pallas(vertices, v0s, v1s, v2s, v3s, average=True))
    assert np.allclose(float(lavg), ref.sum() / B, rtol=5e-3, atol=5e-3)

    print("KERNEL_OK")
</pallas_src>

<mosaic_0001>
module attributes {stable_mosaic.version = 11 : i64} {
  func.func @kernel(%arg0: i32, %arg1: i32, %arg2: memref<3x4x2x128xf32, #tpu.memory_space<vmem>>, %arg3: memref<1x2x128xf32, #tpu.memory_space<vmem>>) attributes {dimension_semantics = [#tpu.dimension_semantics<parallel>, #tpu.dimension_semantics<arbitrary>], iteration_bounds = array<i64: 1, 1>, scalar_prefetch = 0 : i64, scratch_operands = 0 : i64, tpu.core_type = #tpu.core_type<tc>, window_params = [{transform_indices = @transform_0, window_bounds = array<i64: 3, 4, 2, 128>}, {transform_indices = @transform_1, window_bounds = array<i64: 1, 2, 128>}]} {
    %c0_i32 = arith.constant 0 : i32
    %0 = arith.cmpi eq, %arg1, %c0_i32 : i32
    %1 = arith.extui %0 : i1 to i32
    %c0_i32_0 = arith.constant 0 : i32
    %2 = arith.cmpi ne, %1, %c0_i32_0 : i32
    scf.if %2 {
      %cst_21 = arith.constant 0.000000e+00 : f32
      %66 = vector.broadcast %cst_21 : f32 to vector<1x2x128xf32>
      %c0_22 = arith.constant 0 : index
      %c0_23 = arith.constant 0 : index
      %c0_24 = arith.constant 0 : index
      %67 = vector.load %arg3[%c0_22, %c0_23, %c0_24] : memref<1x2x128xf32, #tpu.memory_space<vmem>>, vector<1x2x128xf32>
      tpu.vector_store %arg3[%c0_22, %c0_23, %c0_24], %66 {strides = array<i32>} : memref<1x2x128xf32, #tpu.memory_space<vmem>>, vector<1x2x128xf32>,
    } else {
    }
    %c0 = arith.constant 0 : index
    %c0_1 = arith.constant 0 : index
    %c0_2 = arith.constant 0 : index
    %c0_3 = arith.constant 0 : index
    %3 = vector.load %arg2[%c0, %c0_1, %c0_2, %c0_3] : memref<3x4x2x128xf32, #tpu.memory_space<vmem>>, vector<3x4x2x128xf32>
    %4 = vector.extract_strided_slice %3 {offsets = [0, 0, 0, 0], sizes = [3, 1, 2, 128], strides = [1, 1, 1, 1]} : vector<3x4x2x128xf32> to vector<3x1x2x128xf32>
    %5 = vector.shape_cast %4 : vector<3x1x2x128xf32> to vector<3x2x128xf32>
    %6 = vector.extract_strided_slice %3 {offsets = [0, 1, 0, 0], sizes = [3, 1, 2, 128], strides = [1, 1, 1, 1]} : vector<3x4x2x128xf32> to vector<3x1x2x128xf32>
    %7 = vector.shape_cast %6 : vector<3x1x2x128xf32> to vector<3x2x128xf32>
    %8 = arith.subf %7, %5 : vector<3x2x128xf32>
    %9 = vector.extract_strided_slice %3 {offsets = [0, 2, 0, 0], sizes = [3, 1, 2, 128], strides = [1, 1, 1, 1]} : vector<3x4x2x128xf32> to vector<3x1x2x128xf32>
    %10 = vector.shape_cast %9 : vector<3x1x2x128xf32> to vector<3x2x128xf32>
    %11 = arith.subf %10, %5 : vector<3x2x128xf32>
    %12 = vector.extract_strided_slice %3 {offsets = [0, 3, 0, 0], sizes = [3, 1, 2, 128], strides = [1, 1, 1, 1]} : vector<3x4x2x128xf32> to vector<3x1x2x128xf32>
    %13 = vector.shape_cast %12 : vector<3x1x2x128xf32> to vector<3x2x128xf32>
    %14 = arith.subf %13, %5 : vector<3x2x128xf32>
    %15 = arith.mulf %8, %8 : vector<3x2x128xf32>
    %cst = arith.constant dense<0.000000e+00> : vector<2x128xf32>
    %16 = vector.multi_reduction <add>, %15, %cst [0] : vector<3x2x128xf32> to vector<2x128xf32>
    %17 = arith.mulf %11, %11 : vector<3x2x128xf32>
    %cst_4 = arith.constant dense<0.000000e+00> : vector<2x128xf32>
    %18 = vector.multi_reduction <add>, %17, %cst_4 [0] : vector<3x2x128xf32> to vector<2x128xf32>
    %19 = arith.mulf %14, %14 : vector<3x2x128xf32>
    %cst_5 = arith.constant dense<0.000000e+00> : vector<2x128xf32>
    %20 = vector.multi_reduction <add>, %19, %cst_5 [0] : vector<3x2x128xf32> to vector<2x128xf32>
    %21 = arith.mulf %8, %11 : vector<3x2x128xf32>
    %cst_6 = arith.constant dense<0.000000e+00> : vector<2x128xf32>
    %22 = vector.multi_reduction <add>, %21, %cst_6 [0] : vector<3x2x128xf32> to vector<2x128xf32>
    %23 = arith.mulf %8, %14 : vector<3x2x128xf32>
    %cst_7 = arith.constant dense<0.000000e+00> : vector<2x128xf32>
    %24 = vector.multi_reduction <add>, %23, %cst_7 [0] : vector<3x2x128xf32> to vector<2x128xf32>
    %25 = arith.mulf %11, %14 : vector<3x2x128xf32>
    %cst_8 = arith.constant dense<0.000000e+00> : vector<2x128xf32>
    %26 = vector.multi_reduction <add>, %25, %cst_8 [0] : vector<3x2x128xf32> to vector<2x128xf32>
    %cst_9 = arith.constant 9.99999997E-7 : f32
    %27 = vector.broadcast %cst_9 : f32 to vector<2x128xf32>
    %28 = arith.addf %16, %27 : vector<2x128xf32>
    %29 = tpu.reciprocal %28 {approx = true} : vector<2x128xf32> -> vector<2x128xf32>
    %30 = arith.mulf %22, %22 : vector<2x128xf32>
    %31 = arith.mulf %30, %29 : vector<2x128xf32>
    %32 = arith.subf %18, %31 : vector<2x128xf32>
    %cst_10 = arith.constant 0.000000e+00 : f32
    %33 = vector.broadcast %cst_10 : f32 to vector<2x128xf32>
    %34 = arith.maximumf %32, %33 : vector<2x128xf32>
    %35 = arith.mulf %24, %24 : vector<2x128xf32>
    %36 = arith.mulf %35, %29 : vector<2x128xf32>
    %37 = arith.subf %20, %36 : vector<2x128xf32>
    %cst_11 = arith.constant 0.000000e+00 : f32
    %38 = vector.broadcast %cst_11 : f32 to vector<2x128xf32>
    %39 = arith.maximumf %37, %38 : vector<2x128xf32>
    %40 = arith.mulf %22, %24 : vector<2x128xf32>
    %41 = arith.mulf %40, %29 : vector<2x128xf32>
    %42 = arith.subf %26, %41 : vector<2x128xf32>
    %cst_12 = arith.constant 9.99999997E-7 : f32
    %43 = vector.broadcast %cst_12 : f32 to vector<2x128xf32>
    %44 = arith.addf %34, %43 : vector<2x128xf32>
    %cst_13 = arith.constant 9.99999997E-7 : f32
    %45 = vector.broadcast %cst_13 : f32 to vector<2x128xf32>
    %46 = arith.addf %39, %45 : vector<2x128xf32>
    %47 = arith.mulf %44, %46 : vector<2x128xf32>
    %48 = math.rsqrt %47 : vector<2x128xf32>
    %49 = arith.mulf %42, %48 : vector<2x128xf32>
    %cst_14 = arith.constant 1.000000e+00 : f32
    %50 = vector.broadcast %cst_14 : f32 to vector<2x128xf32>
    %51 = arith.addf %49, %50 : vector<2x128xf32>
    %cst_15 = arith.constant 1.000000e+00 : f32
    %52 = vector.broadcast %cst_15 : f32 to vector<2x128xf32>
    %53 = arith.addf %49, %52 : vector<2x128xf32>
    %54 = arith.mulf %51, %53 : vector<2x128xf32>
    %c1_i32 = arith.constant 1 : i32
    %55 = arith.muli %arg0, %c1_i32 : i32
    %56 = arith.addi %55, %arg1 : i32
    %c128_i32 = arith.constant 128 : i32
    %57 = arith.muli %56, %c128_i32 : i32
    %c128_i32_16 = arith.constant 128 : i32
    %58 = arith.addi %57, %c128_i32_16 : i32
    %c12_i32 = arith.constant 12 : i32
    %59 = arith.cmpi sle, %58, %c12_i32 : i32
    %60 = arith.extui %59 : i1 to i32
    %c0_i32_17 = arith.constant 0 : i32
    %61 = arith.cmpi ne, %60, %c0_i32_17 : i32
    scf.if %61 {
      %c0_21 = arith.constant 0 : index
      %c0_22 = arith.constant 0 : index
      %c0_23 = arith.constant 0 : index
      %66 = vector.load %arg3[%c0_21, %c0_22, %c0_23] : memref<1x2x128xf32, #tpu.memory_space<vmem>>, vector<1x2x128xf32>
      %67 = vector.shape_cast %54 : vector<2x128xf32> to vector<1x2x128xf32>
      %68 = arith.addf %66, %67 : vector<1x2x128xf32>
      %c0_24 = arith.constant 0 : index
      %c0_25 = arith.constant 0 : index
      %c0_26 = arith.constant 0 : index
      %69 = vector.load %arg3[%c0_24, %c0_25, %c0_26] : memref<1x2x128xf32, #tpu.memory_space<vmem>>, vector<1x2x128xf32>
      tpu.vector_store %arg3[%c0_24, %c0_25, %c0_26], %68 {strides = array<i32>} : memref<1x2x128xf32, #tpu.memory_space<vmem>>, vector<1x2x128xf32>,
    } else {
    }
    %c128_i32_18 = arith.constant 128 : i32
    %62 = arith.addi %57, %c128_i32_18 : i32
    %c12_i32_19 = arith.constant 12 : i32
    %63 = arith.cmpi sgt, %62, %c12_i32_19 : i32
    %64 = arith.extui %63 : i1 to i32
    %c0_i32_20 = arith.constant 0 : i32
    %65 = arith.cmpi ne, %64, %c0_i32_20 : i32
    scf.if %65 {
      %66 = tpu.iota {dimensions = array<i32: 1>} : vector<2x128xi32>
      %67 = vector.broadcast %57 : i32 to vector<2x128xi32>
      %68 = arith.addi %66, %67 : vector<2x128xi32>
      %c0_21 = arith.constant 0 : index
      %c0_22 = arith.constant 0 : index
      %c0_23 = arith.constant 0 : index
      %69 = vector.load %arg3[%c0_21, %c0_22, %c0_23] : memref<1x2x128xf32, #tpu.memory_space<vmem>>, vector<1x2x128xf32>
      %c12_i32_24 = arith.constant 12 : i32
      %70 = vector.broadcast %c12_i32_24 : i32 to vector<2x128xi32>
      %71 = arith.cmpi slt, %68, %70 : vector<2x128xi32>
      %cst_25 = arith.constant 0.000000e+00 : f32
      %72 = vector.broadcast %cst_25 : f32 to vector<2x128xf32>
      %73 = arith.select %71, %54, %72 : vector<2x128xi1>, vector<2x128xf32>
      %74 = vector.shape_cast %73 : vector<2x128xf32> to vector<1x2x128xf32>
      %75 = arith.addf %69, %74 : vector<1x2x128xf32>
      %c0_26 = arith.constant 0 : index
      %c0_27 = arith.constant 0 : index
      %c0_28 = arith.constant 0 : index
      %76 = vector.load %arg3[%c0_26, %c0_27, %c0_28] : memref<1x2x128xf32, #tpu.memory_space<vmem>>, vector<1x2x128xf32>
      tpu.vector_store %arg3[%c0_26, %c0_27, %c0_28], %75 {strides = array<i32>} : memref<1x2x128xf32, #tpu.memory_space<vmem>>, vector<1x2x128xf32>,
    } else {
    }
    return
  }
  func.func @transform_0(%arg0: i32, %arg1: i32) -> (i32, i32, i32, i32) {
    %c1_i32 = arith.constant 1 : i32
    %0 = arith.muli %arg0, %c1_i32 : i32
    %1 = arith.addi %0, %arg1 : i32
    %c0_i32 = arith.constant 0 : i32
    %c0_i32_0 = arith.constant 0 : i32
    %c0_i32_1 = arith.constant 0 : i32
    %c0_i32_2 = arith.constant 0 : i32
    return %c0_i32, %c0_i32_0, %c0_i32_1, %1 : i32, i32, i32, i32
  }
  func.func @transform_1(%arg0: i32, %arg1: i32) -> (i32, i32, i32) {
    %c0_i32 = arith.constant 0 : i32
    %c0_i32_0 = arith.constant 0 : i32
    %c0_i32_1 = arith.constant 0 : i32
    return %arg0, %c0_i32, %c0_i32_0 : i32, i32, i32
  }
}

</mosaic_0001>

<llo_original>
// kernel: tpu_custom_call.1
$region0: #{tpu_custom_call.1}
  #allocation0 [shape = 'u32[]', space=smem, size = 0x4, offset = 0x4, fixed_abs, tag = 'smem constant byte address 0x4 - core index']
  #allocation1 [shape = 'u32[144,128]{1,0:T(1,128)}', space=vmem, size = 0x12000, scoped, tag = 'internal scratch']
  %s0 = inlined_call_operand.hbm [shape: f32[3,4,2,128], index: 0, kind: input, shape index: {}]
  %s1 = inlined_call_operand.hbm [shape: f32[1,2,128], index: 1, kind: output, shape index: {}]
  %s2 = sld [smem:[#allocation0]]
  $region30: #{tpu_custom_call.1} parent=0
    _
  %s4 = ssub.s32 1, %s2
  %s5 = scalar_select 0, %s4, %s2
  $region1: #{tpu_custom_call.1} parent=0
    #allocation2 [shape = 'u8[12288]{0}', space=vmem, size = 0x3000, scoped, tag = 'input window, operand 0, single buffered']
    #allocation3 [shape = 's32[1]{0}', space=sflag, size = 0x4, scoped, tag = 'scoped memory for tpu_custom_call.1']
    #allocation4 [shape = 's32[1]{0}', space=sflag, size = 0x4, scoped, tag = 'scoped memory for tpu_custom_call.1']
    #allocation5 [shape = 'u8[1024]{0}', space=vmem, size = 0x400, scoped, tag = 'output window, operand 0, single buffered']
    %6 = vsyncpa [#allocation3], 0
    %7 = vsyncpa [#allocation4], 0
    // Predicated region
    $region2: #{tpu_custom_call.1} parent=1 // pred_check
      _
    $region3: #{tpu_custom_call.1} parent=1 // pred_check_branch
      %9 = sbr.rel (0) target = $region5
    $region4: #{tpu_custom_call.1} parent=1 // pred_region
      %s10 = sadd.s32 0, 0
      %s12 = ssub.s32 384, 384
      %13 = vsyncadd [#allocation3], %s12
      %s14 = smul.addr %s10, 32
      %s15 = scalar_lea.hbm %s0, %s14
      %s16 = sshll.u32 [#allocation2], 4
      %s17 = int_to_ptr.vmem [resolvable:$true] %s16
      %22 = dma.hbm_to_vmem [thread:$0]  %s15, 384, %s17, [#allocation3], 32, 32, 2
    $region5: #{tpu_custom_call.1} parent=1 // pred_fallthru
      _
    // Predicated region
    $region6: #{tpu_custom_call.1} parent=1 // pred_check
      _
    $region7: #{tpu_custom_call.1} parent=1 // pred_check_branch
      %24 = sbr.rel (0) target = $region9
    $region8: #{tpu_custom_call.1} parent=1 // pred_region
      %25 = dma.done [#allocation3], 384
    $region9: #{tpu_custom_call.1} parent=1 // pred_fallthru
      _
    %s26 = sadd.s32 0, 0
    %p27 = scmp.eq.s32.totalorder 0, 0
    // Predicated region
    $region10: #{tpu_custom_call.1} parent=1 // pred_check
      %p28 = pneg %p27
    $region11: #{tpu_custom_call.1} parent=1 // pred_check_branch
      %30 = sbr.rel (%p28) target = $region13
    $region12: #{tpu_custom_call.1} parent=1 // pred_region
      %31 = vst [vmem:[#allocation5] sm:$0x3] 0.0
    $region13: #{tpu_custom_call.1} parent=1 // pred_fallthru
      _
    %v32 = vld [vmem:[#allocation2] sm:$0x3]
    %v33 = vld [vmem:[#allocation2 + $0x2] sm:$0x3]
    %v34 = vld [vmem:[#allocation2 + $0x4] sm:$0x3]
    %v35 = vld [vmem:[#allocation2 + $0x6] sm:$0x3]
    %v36 = vld [vmem:[#allocation2 + $0x8] sm:$0x3]
    %v37 = vld [vmem:[#allocation2 + $0xa] sm:$0x3]
    %v38 = vld [vmem:[#allocation2 + $0xc] sm:$0x3]
    %v39 = vld [vmem:[#allocation2 + $0xe] sm:$0x3]
    %v40 = vld [vmem:[#allocation2 + $0x10] sm:$0x3]
    %v41 = vld [vmem:[#allocation2 + $0x12] sm:$0x3]
    %v42 = vld [vmem:[#allocation2 + $0x14] sm:$0x3]
    %v43 = vld [vmem:[#allocation2 + $0x16] sm:$0x3]
    %v44 = vsub.f32 %v33, %v32
    %v45 = vsub.f32 %v37, %v36
    %v46 = vsub.f32 %v41, %v40
    %v47 = vsub.f32 %v34, %v32
    %v48 = vsub.f32 %v38, %v36
    %v49 = vsub.f32 %v42, %v40
    %v50 = vsub.f32 %v35, %v32
    %v51 = vsub.f32 %v39, %v36
    %v52 = vsub.f32 %v43, %v40
    %v53 = vmul.f32 %v44, %v44
    %v54 = vmul.f32 %v45, %v45
    %v55 = vmul.f32 %v46, %v46
    %vm56 = vcmask 1041408
    %v57 = vsel %vm56, %v53, 0.0
    %v58 = vsel %vm56, %v54, 0.0
    %v59 = vadd.f32 %v57, %v58
    %v60 = vsel %vm56, %v55, 0.0
    %v61 = vadd.f32 %v59, %v60
    %v62 = vmul.f32 %v47, %v47
    %v63 = vmul.f32 %v48, %v48
    %v64 = vmul.f32 %v49, %v49
    %v65 = vsel %vm56, %v62, 0.0
    %v66 = vsel %vm56, %v63, 0.0
    %v67 = vadd.f32 %v65, %v66
    %v68 = vsel %vm56, %v64, 0.0
    %v69 = vadd.f32 %v67, %v68
    %v70 = vmul.f32 %v50, %v50
    %v71 = vmul.f32 %v51, %v51
    %v72 = vmul.f32 %v52, %v52
    %v73 = vsel %vm56, %v70, 0.0
    %v74 = vsel %vm56, %v71, 0.0
    %v75 = vadd.f32 %v73, %v74
    %v76 = vsel %vm56, %v72, 0.0
    %v77 = vadd.f32 %v75, %v76
    %v78 = vmul.f32 %v44, %v47
    %v79 = vmul.f32 %v45, %v48
    %v80 = vmul.f32 %v46, %v49
    %v81 = vsel %vm56, %v78, 0.0
    %v82 = vsel %vm56, %v79, 0.0
    %v83 = vadd.f32 %v81, %v82
    %v84 = vsel %vm56, %v80, 0.0
    %v85 = vadd.f32 %v83, %v84
    %v86 = vmul.f32 %v44, %v50
    %v87 = vmul.f32 %v45, %v51
    %v88 = vmul.f32 %v46, %v52
    %v89 = vsel %vm56, %v86, 0.0
    %v90 = vsel %vm56, %v87, 0.0
    %v91 = vadd.f32 %v89, %v90
    %v92 = vsel %vm56, %v88, 0.0
    %v93 = vadd.f32 %v91, %v92
    %v94 = vmul.f32 %v47, %v50
    %v95 = vmul.f32 %v48, %v51
    %v96 = vmul.f32 %v49, %v52
    %v97 = vsel %vm56, %v94, 0.0
    %v98 = vsel %vm56, %v95, 0.0
    %v99 = vadd.f32 %v97, %v98
    %v100 = vsel %vm56, %v96, 0.0
    %v101 = vadd.f32 %v99, %v100
    %v102 = vadd.f32 %v61, 1e-06
    %v103 = vrcp.pop %v102
    %v104 = vmul.f32 %v85, %v85
    %v105 = vmul.f32 %v104, %v103
    %v106 = vsub.f32 %v69, %v105
    %v107 = vmax.f32 %v106, 0.0
    %v108 = vmul.f32 %v93, %v93
    %v109 = vmul.f32 %v108, %v103
    %v110 = vsub.f32 %v77, %v109
    %v111 = vmax.f32 %v110, 0.0
    %v112 = vmul.f32 %v85, %v93
    %v113 = vmul.f32 %v112, %v103
    %v114 = vsub.f32 %v101, %v113
    %v115 = vadd.f32 %v107, 1e-06
    %v116 = vadd.f32 %v111, 1e-06
    %v117 = vmul.f32 %v115, %v116
    %v118 = vrsqrt.pop %v117
    %v119 = vmul.f32 %v114, %v118
    %v120 = vadd.f32 %v119, 1.0
    %v121 = vmul.f32 %v120, %v120
    %s122 = sadd.s32 0, 0
    %s123 = smul.u32 %s122, 128
    %s124 = sadd.s32 %s123, 128
    %p125 = scmp.le.s32.totalorder %s124, 12
    // Predicated region
    $region14: #{tpu_custom_call.1} parent=1 // pred_check
      %p126 = pneg %p125
    $region15: #{tpu_custom_call.1} parent=1 // pred_check_branch
      %128 = sbr.rel (%p126) target = $region17
    $region16: #{tpu_custom_call.1} parent=1 // pred_region
      %v129 = vld [vmem:[#allocation5] sm:$0x3]
      %v130 = vadd.f32 %v129, %v121
      %131 = vst [vmem:[#allocation5] sm:$0x3] %v130
    $region17: #{tpu_custom_call.1} parent=1 // pred_fallthru
      _
    %p132 = scmp.gt.s32.totalorder %s124, 12
    // Predicated region
    $region18: #{tpu_custom_call.1} parent=1 // pred_check
      %p133 = pneg %p132
    $region19: #{tpu_custom_call.1} parent=1 // pred_check_branch
      %135 = sbr.rel (%p133) target = $region21
    $region20: #{tpu_custom_call.1} parent=1 // pred_region
      %v136 = vlaneseq
      %v137 = vand.u32 %v136, 127
      %v138 = vstv %s123
      %v139 = vadd.s32 %v137, %v138
      %v140 = vld [vmem:[#allocation5] sm:$0x3]
      %vm141 = vcmp.lt.s32.totalorder %v139, 12
      %v142 = vsel %vm141, %v121, 0.0
      %v143 = vadd.f32 %v140, %v142
      %144 = vst [vmem:[#allocation5] sm:$0x3] %v143
    $region21: #{tpu_custom_call.1} parent=1 // pred_fallthru
      _
    // Predicated region
    $region22: #{tpu_custom_call.1} parent=1 // pred_check
      _
    $region23: #{tpu_custom_call.1} parent=1 // pred_check_branch
      %146 = sbr.rel (0) target = $region25
    $region24: #{tpu_custom_call.1} parent=1 // pred_region
      %s148 = ssub.s32 32, 32
      %149 = vsyncadd [#allocation4], %s148
      %s151 = sshll.u32 [#allocation5], 4
      %s152 = int_to_ptr.vmem [resolvable:$true] %s151
      %154 = dma.vmem_to_hbm [thread:$0]  %s152, 32, %s1, [#allocation4]
    $region25: #{tpu_custom_call.1} parent=1 // pred_fallthru
      _
    // Predicated region
    $region26: #{tpu_custom_call.1} parent=1 // pred_check
      _
    $region27: #{tpu_custom_call.1} parent=1 // pred_check_branch
      %156 = sbr.rel (0) target = $region29
    $region28: #{tpu_custom_call.1} parent=1 // pred_region
      %157 = dma.done [#allocation4], 32
    $region29: #{tpu_custom_call.1} parent=1 // pred_fallthru
      _
    %158 = vsyncpa [#allocation3], 1
    %159 = vsyncpa [#allocation4], 1

</llo_original>
